<compile_context>
chip_gen: v7x
topology: tpu7x:2x2x1
jax: 0.10.0
libtpu: 0.0.40
codegen_flags: <defaults>
</compile_context>

<pallas_src>
import functools

import jax
import jax.numpy as jnp
from jax import lax
from jax.experimental import pallas as pl
from jax.experimental.pallas import tpu as pltpu


# ----------------------------------------------------------------------------
# Shared per-tile prep: fused-matmul operand + max-pool taps from the s2d slab.
# ----------------------------------------------------------------------------
def _prep_tile(x_ref, halo_ref, cin, t_rows, ow):
    """Returns op (T, 4G, OW) bf16 and pooled taps (T, Cin, OW) f32."""
    xm = x_ref[0]                                   # (T, G, OW+1)
    xh = halo_ref[0]                                # (1, G, OW+1)
    if t_rows > 1:
        x_lo = jnp.concatenate([xm[1:], xh], axis=0)    # rows t+1, (T, G, OW+1)
    else:
        x_lo = xh

    # Four shifted views; rows via leading-dim slices (free), the +1 column
    # shift is a single lane-shift slice of the tile.
    a = xm[:, :, 0:ow]                              # rows t,   cols w
    b = xm[:, :, 1:ow + 1]                          # rows t,   cols w+1
    c = x_lo[:, :, 0:ow]                            # rows t+1, cols w
    d = x_lo[:, :, 1:ow + 1]                        # rows t+1, cols w+1

    # Fused-conv operand: features ordered [a | b | c | d] (matches w_fused).
    op = jnp.concatenate([a, b, c, d], axis=1)      # (T, 4G, OW)

    # MaxPool 2x2/2: the four taps are group slices of the shifted views.
    # Compare in f32 (v5e has no bf16 VALU; free on v6e/v7x).
    pooled = jnp.maximum(
        jnp.maximum(a[:, 3 * cin:4 * cin, :].astype(jnp.float32),
                    b[:, 2 * cin:3 * cin, :].astype(jnp.float32)),
        jnp.maximum(c[:, cin:2 * cin, :].astype(jnp.float32),
                    d[:, 0:cin, :].astype(jnp.float32)))      # (T, Cin, OW)
    return op, pooled


# ----------------------------------------------------------------------------
# Pass 1: per-tile BN partial statistics (sum, sum of squares) per channel.
# ----------------------------------------------------------------------------
def _stats_kernel(cin, cconv, t_rows, ow, x_ref, halo_ref, w_ref, stats_ref):
    op, pooled = _prep_tile(x_ref, halo_ref, cin, t_rows, ow)
    w = w_ref[...]                                           # (Cconv, 4G) bf16

    csum = jnp.zeros((cconv, 1), jnp.float32)
    csq = jnp.zeros((cconv, 1), jnp.float32)
    for t in range(t_rows):
        conv_t = jnp.dot(w, op[t], preferred_element_type=jnp.float32)
        csum = csum + jnp.sum(conv_t, axis=1, keepdims=True)
        csq = csq + jnp.sum(conv_t * conv_t, axis=1, keepdims=True)

    pool_rowsum = jnp.sum(pooled, axis=0)                    # (Cin, OW)
    pool_rowsq = jnp.sum(pooled * pooled, axis=0)
    psum = jnp.sum(pool_rowsum, axis=1, keepdims=True)       # (Cin, 1)
    psq = jnp.sum(pool_rowsq, axis=1, keepdims=True)

    sums = jnp.concatenate([csum, psum], axis=0)             # (C, 1)
    sqs = jnp.concatenate([csq, psq], axis=0)                # (C, 1)
    stats_ref[0, 0] = jnp.concatenate([sums, sqs], axis=1)   # single (C, 2) store


# ----------------------------------------------------------------------------
# Pass 2: recompute conv/pool, apply folded BN scale/shift + ReLU, store NCHW.
# ----------------------------------------------------------------------------
def _apply_kernel(cin, cconv, t_rows, ow,
                  x_ref, halo_ref, w_ref, scale_ref, shift_ref, out_ref):
    op, pooled = _prep_tile(x_ref, halo_ref, cin, t_rows, ow)
    w = w_ref[...]
    c_total = cconv + cin

    sc_c = scale_ref[0:cconv, :]                             # (Cconv, 1)
    sh_c = shift_ref[0:cconv, :]
    sc_p = scale_ref[cconv:c_total, :]                       # (Cin, 1)
    sh_p = shift_ref[cconv:c_total, :]

    for t in range(t_rows):
        conv_t = jnp.dot(w, op[t], preferred_element_type=jnp.float32)
        yc = jnp.maximum(conv_t * sc_c + sh_c, 0.0)
        out_ref[0, 0:cconv, t, :] = yc.astype(out_ref.dtype)
        yp = jnp.maximum(pooled[t] * sc_p + sh_p, 0.0)
        out_ref[0, cconv:c_total, t, :] = yp.astype(out_ref.dtype)


# ----------------------------------------------------------------------------
# Sizing helpers.
# ----------------------------------------------------------------------------
def _vmem_limit_bytes():
    """~48 MiB on v7x (64 MiB physical), up to 96 MiB on v5e/v6e (128 MiB)."""
    try:
        cap = getattr(pltpu.get_tpu_info(), "vmem_capacity_bytes", None)
    except Exception:
        cap = None
    if not cap:
        cap = 64 * 1024 * 1024
    return int(min(96 * 1024 * 1024, (cap * 3) // 4))


def _pick_tile_rows(oh, ow, g, c_total, vmem_budget, max_rows=32):
    """Largest row tile T with OH % T == 0, 8 | T (or T == OH), within budget."""
    owp = ow + 1

    def tile_bytes(t):
        return (2 * t * owp * g * 2          # main block, double buffered, bf16
                + 2 * owp * g * 2            # halo block, double buffered
                + t * ow * 4 * g * 2         # fused matmul operand (bf16)
                + t * ow * (g // 4) * 4      # pooled taps (f32)
                + 2 * t * ow * c_total * 2)  # output block, double buffered

    budget = vmem_budget // 2
    if oh <= max_rows and oh * ow <= 32768 and tile_bytes(oh) <= budget:
        return oh                            # single tile (T == OH is aligned)
    cands = [t for t in range(8, min(oh, max_rows) + 1, 8)
             if oh % t == 0 and t * ow <= 32768 and tile_bytes(t) <= budget]
    if cands:
        return max(cands)
    # TODO(synk): pad OH to a multiple of 8 for shapes with no aligned divisor.
    return oh


# ----------------------------------------------------------------------------
# Wrapper: NCHW in -> NCHW out (bf16), matching the PyTorch module forward.
# ----------------------------------------------------------------------------
def downsampler_block(x_nchw, conv_w, conv_b, bn_gamma, bn_beta,
                      eps=1e-3, compute_dtype=jnp.bfloat16):
    del conv_b  # Per-channel constant before training-mode BN is cancelled by
                # the mean subtraction -> dropping it is a zero-cost, exact win.

    B, Cin, H, W = x_nchw.shape
    assert H % 2 == 0 and W % 2 == 0, "DownsamplerBlock expects even H, W"
    Cconv = conv_w.shape[0]
    C = Cconv + Cin
    assert bn_gamma.shape[0] == C and bn_beta.shape[0] == C
    OH, OW = H // 2, W // 2
    OWp = OW + 1
    G = 4 * Cin

    vmem_limit = _vmem_limit_bytes()
    T = _pick_tile_rows(OH, OW, G, C, vmem_limit)
    n_tiles = OH // T

    # --- glue: padded space-to-depth slab, spatial columns last (lanes) ------
    xq = x_nchw.astype(compute_dtype)
    xp = jnp.pad(xq, ((0, 0), (0, 0), (1, 1), (1, 1)))
    xs = xp.reshape(B, Cin, OH + 1, 2, OW + 1, 2)
    # -> (B, row, gr, gc, ci, col) -> (B, OH+1, G, OW+1); g = (gr*2+gc)*Cin+ci
    xs2d = xs.transpose(0, 2, 3, 5, 1, 4).reshape(B, OH + 1, G, OWp)

    # --- glue: fused conv weights (Cconv, 4G), feature order [a | b | c | d] -
    w = conv_w.astype(jnp.float32)                                  # (Cconv,Cin,3,3)
    wa = jnp.transpose(w[:, :, 0:2, 0:2], (0, 2, 3, 1)).reshape(Cconv, G)
    wb = jnp.zeros((Cconv, 2, 2, Cin), jnp.float32).at[:, :, 0, :].set(
        jnp.transpose(w[:, :, 0:2, 2], (0, 2, 1))).reshape(Cconv, G)
    wc = jnp.zeros((Cconv, 2, 2, Cin), jnp.float32).at[:, 0, :, :].set(
        jnp.transpose(w[:, :, 2, 0:2], (0, 2, 1))).reshape(Cconv, G)
    wd = jnp.zeros((Cconv, 2, 2, Cin), jnp.float32).at[:, 0, 0, :].set(
        w[:, :, 2, 2]).reshape(Cconv, G)
    w_fused = jnp.concatenate([wa, wb, wc, wd], axis=1).astype(compute_dtype)

    grid = (B, n_tiles)                    # >= 2 parallel steps (v7x megacore)
    main_spec = pl.BlockSpec((1, T, G, OWp), lambda b, i: (b, i, 0, 0))
    halo_spec = pl.BlockSpec((1, 1, G, OWp), lambda b, i: (b, i * T + T, 0, 0))
    w_spec = pl.BlockSpec((Cconv, 4 * G), lambda b, i: (0, 0))
    cparams = pltpu.CompilerParams(
        dimension_semantics=("parallel", "parallel"),
        vmem_limit_bytes=vmem_limit)

    # ---------------- pass 1: per-tile BN partial statistics ----------------
    stats = pl.pallas_call(
        functools.partial(_stats_kernel, Cin, Cconv, T, OW),
        out_shape=jax.ShapeDtypeStruct((B, n_tiles, C, 2), jnp.float32),
        grid=grid,
        in_specs=[main_spec, halo_spec, w_spec],
        out_specs=pl.BlockSpec((1, 1, C, 2), lambda b, i: (b, i, 0, 0)),
        compiler_params=cparams,
    )(xs2d, xs2d, w_fused)

    # --- glue: combine tile partials (f32), fold BN affine into scale/shift --
    n_total = float(B * OH * OW)
    tot = jnp.sum(stats, axis=(0, 1))                        # (C, 2)
    mean = tot[:, 0] / n_total
    var = jnp.maximum(tot[:, 1] / n_total - mean * mean, 0.0)   # biased (PyTorch)
    inv = lax.rsqrt(var + eps)
    gamma = bn_gamma.astype(jnp.float32)
    beta = bn_beta.astype(jnp.float32)
    scale = (gamma * inv).reshape(C, 1)
    shift = (beta - gamma * inv * mean).reshape(C, 1)

    # ---------------- pass 2: normalize + ReLU, direct NCHW bf16 stores ------
    out = pl.pallas_call(
        functools.partial(_apply_kernel, Cin, Cconv, T, OW),
        out_shape=jax.ShapeDtypeStruct((B, C, OH, OW), compute_dtype),
        grid=grid,
        in_specs=[main_spec, halo_spec, w_spec,
                  pl.BlockSpec((C, 1), lambda b, i: (0, 0)),
                  pl.BlockSpec((C, 1), lambda b, i: (0, 0))],
        out_specs=pl.BlockSpec((1, C, T, OW), lambda b, i: (b, 0, i, 0)),
        compiler_params=cparams,
    )(xs2d, xs2d, w_fused, scale, shift)

    return out


# ----------------------------------------------------------------------------
# Pure-JAX reference (same bf16 input/weight rounding as the kernel path).
# ----------------------------------------------------------------------------
def _reference_forward(x_nchw, conv_w, conv_b, gamma, beta,
                       eps=1e-3, compute_dtype=jnp.bfloat16):
    xq = x_nchw.astype(compute_dtype).astype(jnp.float32)
    wq = conv_w.astype(compute_dtype).astype(jnp.float32)
    conv = lax.conv_general_dilated(
        xq, wq, window_strides=(2, 2), padding=((1, 1), (1, 1)),
        dimension_numbers=("NCHW", "OIHW", "NCHW"))
    conv = conv + conv_b[None, :, None, None]
    pooled = lax.reduce_window(
        xq, -jnp.inf, lax.max,
        window_dimensions=(1, 1, 2, 2), window_strides=(1, 1, 2, 2),
        padding="VALID")
    y = jnp.concatenate([conv, pooled], axis=1)
    mean = jnp.mean(y, axis=(0, 2, 3), keepdims=True)
    var = jnp.mean(jnp.square(y - mean), axis=(0, 2, 3), keepdims=True)
    yn = (y - mean) * lax.rsqrt(var + eps)
    return jnp.maximum(yn * gamma[None, :, None, None]
                       + beta[None, :, None, None], 0.0)


if __name__ == "__main__":
    # DownsamplerBlock(ninput=4, noutput=8): conv 4->4, pool keeps 4, concat -> 8.
    B, Cin, H, W = 2, 4, 16, 16
    Cout = 8
    Cconv = Cout - Cin

    key = jax.random.PRNGKey(0)
    k_x, k_w, k_b, k_g, k_be = jax.random.split(key, 5)

    x = jax.random.normal(k_x, (B, Cin, H, W), dtype=jnp.float32)          # NCHW
    conv_w = jax.random.normal(k_w, (Cconv, Cin, 3, 3), dtype=jnp.float32) * 0.1
    conv_b = jax.random.normal(k_b, (Cconv,), dtype=jnp.float32) * 0.1
    bn_gamma = 1.0 + 0.1 * jax.random.normal(k_g, (Cout,), dtype=jnp.float32)
    bn_beta = 0.1 * jax.random.normal(k_be, (Cout,), dtype=jnp.float32)

    out = downsampler_block(x, conv_w, conv_b, bn_gamma, bn_beta)
    out = jax.block_until_ready(out)

    ref = _reference_forward(x, conv_w, conv_b, bn_gamma, bn_beta)
    assert out.shape == (B, Cout, H // 2, W // 2), out.shape
    out_f32 = out.astype(jnp.float32)
    # bf16 output stream -> loosened tolerance vs. the f32 reference.
    assert jnp.allclose(out_f32, ref, rtol=2e-2, atol=2e-2), \
        float(jnp.max(jnp.abs(out_f32 - ref)))

    print("KERNEL_OK")
</pallas_src>

<mosaic_0001>
module attributes {stable_mosaic.version = 11 : i64} {
  func.func @_stats_kernel(%arg0: i32, %arg1: i32, %arg2: memref<1x8x16x9xbf16, #tpu.memory_space<vmem>>, %arg3: memref<1x1x16x9xbf16, #tpu.memory_space<vmem>>, %arg4: memref<4x64xbf16, #tpu.memory_space<vmem>>, %arg5: memref<1x1x8x2xf32, #tpu.memory_space<vmem>>) attributes {dimension_semantics = [#tpu.dimension_semantics<parallel>, #tpu.dimension_semantics<parallel>], iteration_bounds = array<i64: 2, 1>, scalar_prefetch = 0 : i64, scratch_operands = 0 : i64, tpu.core_type = #tpu.core_type<tc>, window_params = [{transform_indices = @transform_0, window_bounds = array<i64: 1, 8, 16, 9>}, {transform_indices = @transform_1, window_bounds = array<i64: 1, 1, 16, 9>}, {pipeline_mode = #tpu.pipeline_mode<synchronous>, transform_indices = @transform_2, window_bounds = array<i64: 4, 64>}, {transform_indices = @transform_3, window_bounds = array<i64: 1, 1, 8, 2>}]} {
    %c0 = arith.constant 0 : index
    %c0_0 = arith.constant 0 : index
    %c0_1 = arith.constant 0 : index
    %c0_2 = arith.constant 0 : index
    %0 = vector.load %arg2[%c0, %c0_0, %c0_1, %c0_2] : memref<1x8x16x9xbf16, #tpu.memory_space<vmem>>, vector<1x8x16x9xbf16>
    %1 = vector.shape_cast %0 : vector<1x8x16x9xbf16> to vector<8x16x9xbf16>
    %c0_3 = arith.constant 0 : index
    %c0_4 = arith.constant 0 : index
    %c0_5 = arith.constant 0 : index
    %c0_6 = arith.constant 0 : index
    %2 = vector.load %arg3[%c0_3, %c0_4, %c0_5, %c0_6] : memref<1x1x16x9xbf16, #tpu.memory_space<vmem>>, vector<1x1x16x9xbf16>
    %3 = vector.shape_cast %2 : vector<1x1x16x9xbf16> to vector<1x16x9xbf16>
    %4 = vector.extract_strided_slice %1 {offsets = [1, 0, 0], sizes = [7, 16, 9], strides = [1, 1, 1]} : vector<8x16x9xbf16> to vector<7x16x9xbf16>
    %5 = tpu.concatenate %4, %3 in 0 : vector<7x16x9xbf16>, vector<1x16x9xbf16> -> vector<8x16x9xbf16>
    %6 = vector.extract_strided_slice %1 {offsets = [0, 0, 0], sizes = [8, 16, 8], strides = [1, 1, 1]} : vector<8x16x9xbf16> to vector<8x16x8xbf16>
    %7 = vector.extract_strided_slice %1 {offsets = [0, 0, 1], sizes = [8, 16, 8], strides = [1, 1, 1]} : vector<8x16x9xbf16> to vector<8x16x8xbf16>
    %8 = vector.extract_strided_slice %5 {offsets = [0, 0, 0], sizes = [8, 16, 8], strides = [1, 1, 1]} : vector<8x16x9xbf16> to vector<8x16x8xbf16>
    %9 = vector.extract_strided_slice %5 {offsets = [0, 0, 1], sizes = [8, 16, 8], strides = [1, 1, 1]} : vector<8x16x9xbf16> to vector<8x16x8xbf16>
    %10 = tpu.concatenate %6, %7, %8, %9 in 1 : vector<8x16x8xbf16>, vector<8x16x8xbf16>, vector<8x16x8xbf16>, vector<8x16x8xbf16> -> vector<8x64x8xbf16>
    %11 = vector.extract_strided_slice %6 {offsets = [0, 12, 0], sizes = [8, 4, 8], strides = [1, 1, 1]} : vector<8x16x8xbf16> to vector<8x4x8xbf16>
    %12 = arith.extf %11 : vector<8x4x8xbf16> to vector<8x4x8xf32>
    %13 = vector.extract_strided_slice %7 {offsets = [0, 8, 0], sizes = [8, 4, 8], strides = [1, 1, 1]} : vector<8x16x8xbf16> to vector<8x4x8xbf16>
    %14 = arith.extf %13 : vector<8x4x8xbf16> to vector<8x4x8xf32>
    %15 = arith.maximumf %12, %14 : vector<8x4x8xf32>
    %16 = vector.extract_strided_slice %8 {offsets = [0, 4, 0], sizes = [8, 4, 8], strides = [1, 1, 1]} : vector<8x16x8xbf16> to vector<8x4x8xbf16>
    %17 = arith.extf %16 : vector<8x4x8xbf16> to vector<8x4x8xf32>
    %18 = vector.extract_strided_slice %9 {offsets = [0, 0, 0], sizes = [8, 4, 8], strides = [1, 1, 1]} : vector<8x16x8xbf16> to vector<8x4x8xbf16>
    %19 = arith.extf %18 : vector<8x4x8xbf16> to vector<8x4x8xf32>
    %20 = arith.maximumf %17, %19 : vector<8x4x8xf32>
    %21 = arith.maximumf %15, %20 : vector<8x4x8xf32>
    %c0_7 = arith.constant 0 : index
    %c0_8 = arith.constant 0 : index
    %22 = vector.load %arg4[%c0_7, %c0_8] : memref<4x64xbf16, #tpu.memory_space<vmem>>, vector<4x64xbf16>
    %cst = arith.constant 0.000000e+00 : f32
    %23 = vector.broadcast %cst : f32 to vector<4x1xf32>
    %cst_9 = arith.constant 0.000000e+00 : f32
    %24 = vector.broadcast %cst_9 : f32 to vector<4x1xf32>
    %25 = vector.extract_strided_slice %10 {offsets = [0, 0, 0], sizes = [1, 64, 8], strides = [1, 1, 1]} : vector<8x64x8xbf16> to vector<1x64x8xbf16>
    %26 = vector.shape_cast %25 : vector<1x64x8xbf16> to vector<64x8xbf16>
    %cst_10 = arith.constant dense<0.000000e+00> : vector<4x8xf32>
    %27 = tpu.matmul %22, %26, %cst_10 {dimension_numbers = #tpu.dot_dimension_numbers<[1], [0], [0], [1], [0, 0, 1, 1], [], []>} : vector<4x64xbf16>, vector<64x8xbf16>, vector<4x8xf32> -> vector<4x8xf32>
    %cst_11 = arith.constant dense<0.000000e+00> : vector<4xf32>
    %28 = vector.multi_reduction <add>, %27, %cst_11 [1] : vector<4x8xf32> to vector<4xf32>
    %29 = vector.shape_cast %28 : vector<4xf32> to vector<4x1xf32>
    %30 = arith.addf %23, %29 : vector<4x1xf32>
    %31 = arith.mulf %27, %27 : vector<4x8xf32>
    %cst_12 = arith.constant dense<0.000000e+00> : vector<4xf32>
    %32 = vector.multi_reduction <add>, %31, %cst_12 [1] : vector<4x8xf32> to vector<4xf32>
    %33 = vector.shape_cast %32 : vector<4xf32> to vector<4x1xf32>
    %34 = arith.addf %24, %33 : vector<4x1xf32>
    %35 = vector.extract_strided_slice %10 {offsets = [1, 0, 0], sizes = [1, 64, 8], strides = [1, 1, 1]} : vector<8x64x8xbf16> to vector<1x64x8xbf16>
    %36 = vector.shape_cast %35 : vector<1x64x8xbf16> to vector<64x8xbf16>
    %cst_13 = arith.constant dense<0.000000e+00> : vector<4x8xf32>
    %37 = tpu.matmul %22, %36, %cst_13 {dimension_numbers = #tpu.dot_dimension_numbers<[1], [0], [0], [1], [0, 0, 1, 1], [], []>} : vector<4x64xbf16>, vector<64x8xbf16>, vector<4x8xf32> -> vector<4x8xf32>
    %cst_14 = arith.constant dense<0.000000e+00> : vector<4xf32>
    %38 = vector.multi_reduction <add>, %37, %cst_14 [1] : vector<4x8xf32> to vector<4xf32>
    %39 = vector.shape_cast %38 : vector<4xf32> to vector<4x1xf32>
    %40 = arith.addf %30, %39 : vector<4x1xf32>
    %41 = arith.mulf %37, %37 : vector<4x8xf32>
    %cst_15 = arith.constant dense<0.000000e+00> : vector<4xf32>
    %42 = vector.multi_reduction <add>, %41, %cst_15 [1] : vector<4x8xf32> to vector<4xf32>
    %43 = vector.shape_cast %42 : vector<4xf32> to vector<4x1xf32>
    %44 = arith.addf %34, %43 : vector<4x1xf32>
    %45 = vector.extract_strided_slice %10 {offsets = [2, 0, 0], sizes = [1, 64, 8], strides = [1, 1, 1]} : vector<8x64x8xbf16> to vector<1x64x8xbf16>
    %46 = vector.shape_cast %45 : vector<1x64x8xbf16> to vector<64x8xbf16>
    %cst_16 = arith.constant dense<0.000000e+00> : vector<4x8xf32>
    %47 = tpu.matmul %22, %46, %cst_16 {dimension_numbers = #tpu.dot_dimension_numbers<[1], [0], [0], [1], [0, 0, 1, 1], [], []>} : vector<4x64xbf16>, vector<64x8xbf16>, vector<4x8xf32> -> vector<4x8xf32>
    %cst_17 = arith.constant dense<0.000000e+00> : vector<4xf32>
    %48 = vector.multi_reduction <add>, %47, %cst_17 [1] : vector<4x8xf32> to vector<4xf32>
    %49 = vector.shape_cast %48 : vector<4xf32> to vector<4x1xf32>
    %50 = arith.addf %40, %49 : vector<4x1xf32>
    %51 = arith.mulf %47, %47 : vector<4x8xf32>
    %cst_18 = arith.constant dense<0.000000e+00> : vector<4xf32>
    %52 = vector.multi_reduction <add>, %51, %cst_18 [1] : vector<4x8xf32> to vector<4xf32>
    %53 = vector.shape_cast %52 : vector<4xf32> to vector<4x1xf32>
    %54 = arith.addf %44, %53 : vector<4x1xf32>
    %55 = vector.extract_strided_slice %10 {offsets = [3, 0, 0], sizes = [1, 64, 8], strides = [1, 1, 1]} : vector<8x64x8xbf16> to vector<1x64x8xbf16>
    %56 = vector.shape_cast %55 : vector<1x64x8xbf16> to vector<64x8xbf16>
    %cst_19 = arith.constant dense<0.000000e+00> : vector<4x8xf32>
    %57 = tpu.matmul %22, %56, %cst_19 {dimension_numbers = #tpu.dot_dimension_numbers<[1], [0], [0], [1], [0, 0, 1, 1], [], []>} : vector<4x64xbf16>, vector<64x8xbf16>, vector<4x8xf32> -> vector<4x8xf32>
    %cst_20 = arith.constant dense<0.000000e+00> : vector<4xf32>
    %58 = vector.multi_reduction <add>, %57, %cst_20 [1] : vector<4x8xf32> to vector<4xf32>
    %59 = vector.shape_cast %58 : vector<4xf32> to vector<4x1xf32>
    %60 = arith.addf %50, %59 : vector<4x1xf32>
    %61 = arith.mulf %57, %57 : vector<4x8xf32>
    %cst_21 = arith.constant dense<0.000000e+00> : vector<4xf32>
    %62 = vector.multi_reduction <add>, %61, %cst_21 [1] : vector<4x8xf32> to vector<4xf32>
    %63 = vector.shape_cast %62 : vector<4xf32> to vector<4x1xf32>
    %64 = arith.addf %54, %63 : vector<4x1xf32>
    %65 = vector.extract_strided_slice %10 {offsets = [4, 0, 0], sizes = [1, 64, 8], strides = [1, 1, 1]} : vector<8x64x8xbf16> to vector<1x64x8xbf16>
    %66 = vector.shape_cast %65 : vector<1x64x8xbf16> to vector<64x8xbf16>
    %cst_22 = arith.constant dense<0.000000e+00> : vector<4x8xf32>
    %67 = tpu.matmul %22, %66, %cst_22 {dimension_numbers = #tpu.dot_dimension_numbers<[1], [0], [0], [1], [0, 0, 1, 1], [], []>} : vector<4x64xbf16>, vector<64x8xbf16>, vector<4x8xf32> -> vector<4x8xf32>
    %cst_23 = arith.constant dense<0.000000e+00> : vector<4xf32>
    %68 = vector.multi_reduction <add>, %67, %cst_23 [1] : vector<4x8xf32> to vector<4xf32>
    %69 = vector.shape_cast %68 : vector<4xf32> to vector<4x1xf32>
    %70 = arith.addf %60, %69 : vector<4x1xf32>
    %71 = arith.mulf %67, %67 : vector<4x8xf32>
    %cst_24 = arith.constant dense<0.000000e+00> : vector<4xf32>
    %72 = vector.multi_reduction <add>, %71, %cst_24 [1] : vector<4x8xf32> to vector<4xf32>
    %73 = vector.shape_cast %72 : vector<4xf32> to vector<4x1xf32>
    %74 = arith.addf %64, %73 : vector<4x1xf32>
    %75 = vector.extract_strided_slice %10 {offsets = [5, 0, 0], sizes = [1, 64, 8], strides = [1, 1, 1]} : vector<8x64x8xbf16> to vector<1x64x8xbf16>
    %76 = vector.shape_cast %75 : vector<1x64x8xbf16> to vector<64x8xbf16>
    %cst_25 = arith.constant dense<0.000000e+00> : vector<4x8xf32>
    %77 = tpu.matmul %22, %76, %cst_25 {dimension_numbers = #tpu.dot_dimension_numbers<[1], [0], [0], [1], [0, 0, 1, 1], [], []>} : vector<4x64xbf16>, vector<64x8xbf16>, vector<4x8xf32> -> vector<4x8xf32>
    %cst_26 = arith.constant dense<0.000000e+00> : vector<4xf32>
    %78 = vector.multi_reduction <add>, %77, %cst_26 [1] : vector<4x8xf32> to vector<4xf32>
    %79 = vector.shape_cast %78 : vector<4xf32> to vector<4x1xf32>
    %80 = arith.addf %70, %79 : vector<4x1xf32>
    %81 = arith.mulf %77, %77 : vector<4x8xf32>
    %cst_27 = arith.constant dense<0.000000e+00> : vector<4xf32>
    %82 = vector.multi_reduction <add>, %81, %cst_27 [1] : vector<4x8xf32> to vector<4xf32>
    %83 = vector.shape_cast %82 : vector<4xf32> to vector<4x1xf32>
    %84 = arith.addf %74, %83 : vector<4x1xf32>
    %85 = vector.extract_strided_slice %10 {offsets = [6, 0, 0], sizes = [1, 64, 8], strides = [1, 1, 1]} : vector<8x64x8xbf16> to vector<1x64x8xbf16>
    %86 = vector.shape_cast %85 : vector<1x64x8xbf16> to vector<64x8xbf16>
    %cst_28 = arith.constant dense<0.000000e+00> : vector<4x8xf32>
    %87 = tpu.matmul %22, %86, %cst_28 {dimension_numbers = #tpu.dot_dimension_numbers<[1], [0], [0], [1], [0, 0, 1, 1], [], []>} : vector<4x64xbf16>, vector<64x8xbf16>, vector<4x8xf32> -> vector<4x8xf32>
    %cst_29 = arith.constant dense<0.000000e+00> : vector<4xf32>
    %88 = vector.multi_reduction <add>, %87, %cst_29 [1] : vector<4x8xf32> to vector<4xf32>
    %89 = vector.shape_cast %88 : vector<4xf32> to vector<4x1xf32>
    %90 = arith.addf %80, %89 : vector<4x1xf32>
    %91 = arith.mulf %87, %87 : vector<4x8xf32>
    %cst_30 = arith.constant dense<0.000000e+00> : vector<4xf32>
    %92 = vector.multi_reduction <add>, %91, %cst_30 [1] : vector<4x8xf32> to vector<4xf32>
    %93 = vector.shape_cast %92 : vector<4xf32> to vector<4x1xf32>
    %94 = arith.addf %84, %93 : vector<4x1xf32>
    %95 = vector.extract_strided_slice %10 {offsets = [7, 0, 0], sizes = [1, 64, 8], strides = [1, 1, 1]} : vector<8x64x8xbf16> to vector<1x64x8xbf16>
    %96 = vector.shape_cast %95 : vector<1x64x8xbf16> to vector<64x8xbf16>
    %cst_31 = arith.constant dense<0.000000e+00> : vector<4x8xf32>
    %97 = tpu.matmul %22, %96, %cst_31 {dimension_numbers = #tpu.dot_dimension_numbers<[1], [0], [0], [1], [0, 0, 1, 1], [], []>} : vector<4x64xbf16>, vector<64x8xbf16>, vector<4x8xf32> -> vector<4x8xf32>
    %cst_32 = arith.constant dense<0.000000e+00> : vector<4xf32>
    %98 = vector.multi_reduction <add>, %97, %cst_32 [1] : vector<4x8xf32> to vector<4xf32>
    %99 = vector.shape_cast %98 : vector<4xf32> to vector<4x1xf32>
    %100 = arith.addf %90, %99 : vector<4x1xf32>
    %101 = arith.mulf %97, %97 : vector<4x8xf32>
    %cst_33 = arith.constant dense<0.000000e+00> : vector<4xf32>
    %102 = vector.multi_reduction <add>, %101, %cst_33 [1] : vector<4x8xf32> to vector<4xf32>
    %103 = vector.shape_cast %102 : vector<4xf32> to vector<4x1xf32>
    %104 = arith.addf %94, %103 : vector<4x1xf32>
    %cst_34 = arith.constant dense<0.000000e+00> : vector<4x8xf32>
    %105 = vector.multi_reduction <add>, %21, %cst_34 [0] : vector<8x4x8xf32> to vector<4x8xf32>
    %106 = arith.mulf %21, %21 : vector<8x4x8xf32>
    %cst_35 = arith.constant dense<0.000000e+00> : vector<4x8xf32>
    %107 = vector.multi_reduction <add>, %106, %cst_35 [0] : vector<8x4x8xf32> to vector<4x8xf32>
    %cst_36 = arith.constant dense<0.000000e+00> : vector<4xf32>
    %108 = vector.multi_reduction <add>, %105, %cst_36 [1] : vector<4x8xf32> to vector<4xf32>
    %109 = vector.shape_cast %108 : vector<4xf32> to vector<4x1xf32>
    %cst_37 = arith.constant dense<0.000000e+00> : vector<4xf32>
    %110 = vector.multi_reduction <add>, %107, %cst_37 [1] : vector<4x8xf32> to vector<4xf32>
    %111 = vector.shape_cast %110 : vector<4xf32> to vector<4x1xf32>
    %112 = tpu.concatenate %100, %109 in 0 : vector<4x1xf32>, vector<4x1xf32> -> vector<8x1xf32>
    %113 = tpu.concatenate %104, %111 in 0 : vector<4x1xf32>, vector<4x1xf32> -> vector<8x1xf32>
    %114 = tpu.concatenate %112, %113 in 1 : vector<8x1xf32>, vector<8x1xf32> -> vector<8x2xf32>
    %c0_38 = arith.constant 0 : index
    %c0_39 = arith.constant 0 : index
    %c0_40 = arith.constant 0 : index
    %c0_41 = arith.constant 0 : index
    %115 = vector.load %arg5[%c0_38, %c0_39, %c0_40, %c0_41] : memref<1x1x8x2xf32, #tpu.memory_space<vmem>>, vector<1x1x8x2xf32>
    %116 = vector.shape_cast %115 : vector<1x1x8x2xf32> to vector<8x2xf32>
    %117 = vector.shape_cast %114 : vector<8x2xf32> to vector<1x1x8x2xf32>
    tpu.vector_store %arg5[%c0_38, %c0_39, %c0_40, %c0_41], %117 {strides = array<i32>} : memref<1x1x8x2xf32, #tpu.memory_space<vmem>>, vector<1x1x8x2xf32>,
    return
  }
  func.func @transform_0(%arg0: i32, %arg1: i32) -> (i32, i32, i32, i32) {
    %c0_i32 = arith.constant 0 : i32
    %c0_i32_0 = arith.constant 0 : i32
    %c0_i32_1 = arith.constant 0 : i32
    return %arg0, %arg1, %c0_i32, %c0_i32_0 : i32, i32, i32, i32
  }
  func.func @transform_1(%arg0: i32, %arg1: i32) -> (i32, i32, i32, i32) {
    %c8_i32 = arith.constant 8 : i32
    %0 = arith.muli %arg1, %c8_i32 : i32
    %c8_i32_0 = arith.constant 8 : i32
    %1 = arith.addi %0, %c8_i32_0 : i32
    %c0_i32 = arith.constant 0 : i32
    %c0_i32_1 = arith.constant 0 : i32
    %c0_i32_2 = arith.constant 0 : i32
    return %arg0, %1, %c0_i32, %c0_i32_1 : i32, i32, i32, i32
  }
  func.func @transform_2(%arg0: i32, %arg1: i32) -> (i32, i32) {
    %c0_i32 = arith.constant 0 : i32
    %c0_i32_0 = arith.constant 0 : i32
    %c0_i32_1 = arith.constant 0 : i32
    return %c0_i32, %c0_i32_0 : i32, i32
  }
  func.func @transform_3(%arg0: i32, %arg1: i32) -> (i32, i32, i32, i32) {
    %c0_i32 = arith.constant 0 : i32
    %c0_i32_0 = arith.constant 0 : i32
    %c0_i32_1 = arith.constant 0 : i32
    return %arg0, %arg1, %c0_i32, %c0_i32_0 : i32, i32, i32, i32
  }
}

</mosaic_0001>

<llo_original>
// kernel: tpu_custom_call.1
$region0: #{tpu_custom_call.1}
  #allocation0 [shape = 'u32[]', space=smem, size = 0x4, offset = 0x4, fixed_abs, tag = 'smem constant byte address 0x4 - core index']
  #allocation1 [shape = 'u32[144,128]{1,0:T(1,128)}', space=vmem, size = 0x12000, scoped, tag = 'internal scratch']
  %s0 = inlined_call_operand.vmem [shape: bf16[2,9,16,9], index: 0, kind: input, shape index: {}]
  %s1 = inlined_call_operand.vmem [shape: bf16[2,9,16,9], index: 1, kind: input, shape index: {}]
  %s2 = inlined_call_operand.vmem [shape: bf16[4,64], index: 2, kind: input, shape index: {}]
  %s3 = inlined_call_operand.vmem [shape: f32[2,1,8,2], index: 3, kind: output, shape index: {}]
  %s4 = sld [smem:[#allocation0]]
  $region45: #{tpu_custom_call.1} parent=0
    _
  %s6 = ssub.s32 1, %s4
  %s7 = scalar_select 0, %s6, %s4
  loop: start=0, step=1, limit=4
  $region2: #{tpu_custom_call.1} parent=0 // loop_pre_header
    _
  $region3: #{tpu_custom_call.1} parent=0 // loop_header
    %s9 = sphi 0, %s13
    %p10 = scmp.ge.s32.totalorder %s9, 4
    %s16 = sphi 0, %s28
    %s17 = sphi 0, %s24
    %s18 = sphi 0, %s16
    %s19 = sphi 0, %s17
    %s20 = sphi 0, %s18
    %s21 = sphi 0, %s19
    %s33 = sphi 0, %s35
    %s36 = sphi 0, %s33
    %s37 = sphi 0, %s36
    %s53 = sphi 0, %s37
    %s65 = sphi 0, %s67
    %s68 = sphi 0, %s65
    %s69 = sphi 0, %s68
    %s85 = sphi 0, %s69
    %s89 = sphi 0, %s89
    %s91 = sphi 0, %s89
    %s92 = sphi 0, %s91
    %s106 = sphi 0, %s92
    %s114 = sphi 0, %s116
    %s117 = sphi 0, %s114
    %s118 = sphi 0, %s117
    %s134 = sphi 0, %s118
  $region4: #{tpu_custom_call.1} parent=0 // loop_header_branch
    %12 = sbr.rel (%p10) target = $region8
  $region5: #{tpu_custom_call.1} parent=0 // loop_body
    %s14 = ssub.s32 %s9, 1
    %s15 = ssub.s32 %s9, 2
    %s22 = sadd.s32 1, %s17
    %p23 = scmp.ge.s32.totalorder %s22, 1
    %s24 = scalar_select %p23, 0, %s22
    %s25 = sadd.s32 1, %s16
    %s26 = scalar_select %p23, %s25, %s16
    %p27 = scmp.ge.s32.totalorder %s26, 2
    %s28 = scalar_select %p27, 0, %s26
    %s29 = ssub.s32 %s16, %s28
    %s30 = ssub.s32 %s17, %s24
    %s31 = sor.u32 %s29, %s30
    %p32 = scmp.eq.s32.totalorder %s31, 0
    %s34 = sadd.s32 %s33, 1
    %s35 = scalar_select %p32, %s33, %s34
    %p38 = pneg %p32
    %p39 = scmp.eq.s32.totalorder %s9, 1
    %p40 = por %p38, %p39
    %p41 = scmp.ne.s32.totalorder %s33, %s36
    %p42 = scmp.eq.s32.totalorder %s9, 0
    %p43 = por %p41, %p42
    %p44 = scmp.ne.s32.totalorder %s33, %s36
    %p45 = scmp.eq.s32.totalorder %s14, 1
    %p46 = por %p44, %p45
    %p47 = scmp.ne.s32.totalorder %s36, %s37
    %p48 = scmp.eq.s32.totalorder %s14, 0
    %p49 = por %p47, %p48
    %p50 = scmp.ne.s32.totalorder %s36, %s37
    %p51 = scmp.eq.s32.totalorder %s15, 1
    %p52 = por %p50, %p51
    %p54 = scmp.ne.s32.totalorder %s37, %s53
    %p55 = scmp.eq.s32.totalorder %s15, 0
    %p56 = por %p54, %p55
    %s57 = smul.u32 %s17, 8
    %s58 = sadd.s32 %s57, 8
    %s59 = smul.u32 %s24, 8
    %s60 = sadd.s32 %s59, 8
    %s61 = ssub.s32 %s16, %s28
    %s62 = ssub.s32 %s58, %s60
    %s63 = sor.u32 %s61, %s62
    %p64 = scmp.eq.s32.totalorder %s63, 0
    %s66 = sadd.s32 %s65, 1
    %s67 = scalar_select %p64, %s65, %s66
    %p70 = pneg %p64
    %p71 = scmp.eq.s32.totalorder %s9, 1
    %p72 = por %p70, %p71
    %p73 = scmp.ne.s32.totalorder %s65, %s68
    %p74 = scmp.eq.s32.totalorder %s9, 0
    %p75 = por %p73, %p74
    %p76 = scmp.ne.s32.totalorder %s65, %s68
    %p77 = scmp.eq.s32.totalorder %s14, 1
    %p78 = por %p76, %p77
    %p79 = scmp.ne.s32.totalorder %s68, %s69
    %p80 = scmp.eq.s32.totalorder %s14, 0
    %p81 = por %p79, %p80
    %p82 = scmp.ne.s32.totalorder %s68, %s69
    %p83 = scmp.eq.s32.totalorder %s15, 1
    %p84 = por %p82, %p83
    %p86 = scmp.ne.s32.totalorder %s69, %s85
    %p87 = scmp.eq.s32.totalorder %s15, 0
    %p88 = por %p86, %p87
    %s90 = sadd.s32 %s89, 1
    %p93 = scmp.eq.s32.totalorder %s9, 1
    %p94 = scmp.ne.s32.totalorder %s89, %s91
    %p95 = scmp.eq.s32.totalorder %s9, 0
    %p96 = por %p94, %p95
    %p97 = scmp.ne.s32.totalorder %s89, %s91
    %p98 = scmp.eq.s32.totalorder %s14, 1
    %p99 = por %p97, %p98
    %p100 = scmp.ne.s32.totalorder %s91, %s92
    %p101 = scmp.eq.s32.totalorder %s14, 0
    %p102 = por %p100, %p101
    %p103 = scmp.ne.s32.totalorder %s91, %s92
    %p104 = scmp.eq.s32.totalorder %s15, 1
    %p105 = por %p103, %p104
    %p107 = scmp.ne.s32.totalorder %s92, %s106
    %p108 = scmp.eq.s32.totalorder %s15, 0
    %p109 = por %p107, %p108
    %s110 = ssub.s32 %s16, %s28
    %s111 = ssub.s32 %s17, %s24
    %s112 = sor.u32 %s110, %s111
    %p113 = scmp.eq.s32.totalorder %s112, 0
    %s115 = sadd.s32 %s114, 1
    %s116 = scalar_select %p113, %s114, %s115
    %p119 = pneg %p113
    %p120 = scmp.eq.s32.totalorder %s9, 1
    %p121 = por %p119, %p120
    %p122 = scmp.ne.s32.totalorder %s114, %s117
    %p123 = scmp.eq.s32.totalorder %s9, 0
    %p124 = por %p122, %p123
    %p125 = scmp.ne.s32.totalorder %s114, %s117
    %p126 = scmp.eq.s32.totalorder %s14, 1
    %p127 = por %p125, %p126
    %p128 = scmp.ne.s32.totalorder %s117, %s118
    %p129 = scmp.eq.s32.totalorder %s14, 0
    %p130 = por %p128, %p129
    %p131 = scmp.ne.s32.totalorder %s117, %s118
    %p132 = scmp.eq.s32.totalorder %s15, 1
    %p133 = por %p131, %p132
    %p135 = scmp.ne.s32.totalorder %s118, %s134
    %p136 = scmp.eq.s32.totalorder %s15, 0
    %p137 = por %p135, %p136
    %p138 = scmp.le.s32.totalorder 1, %s9
    %p139 = scmp.lt.s32.totalorder %s9, 3
    %p140 = pnand %p138, %p139
    %p141 = pneg %p140
    // Predicated region
    $region9: #{tpu_custom_call.1} parent=5 // pred_check
      _
    $region10: #{tpu_custom_call.1} parent=5 // pred_check_branch
      %143 = sbr.rel (%p140) target = $region12
    $region11: #{tpu_custom_call.1} parent=5 // pred_region
      %s144 = ssub.s32 %s9, 1
      // Predicated region
      $region13: #{tpu_custom_call.1} parent=11 // pred_check
        %p145 = pneg %p102
      $region14: #{tpu_custom_call.1} parent=11 // pred_check_branch
        %147 = sbr.rel (%p145) target = $region16
      $region15: #{tpu_custom_call.1} parent=11 // pred_region
        _
      $region16: #{tpu_custom_call.1} parent=11 // pred_fallthru
        _
    $region12: #{tpu_custom_call.1} parent=5 // pred_fallthru
      _
    %p148 = scmp.lt.s32.totalorder %s9, 2
    // Predicated region
    $region17: #{tpu_custom_call.1} parent=5 // pred_check
      %p149 = pneg %p148
    $region18: #{tpu_custom_call.1} parent=5 // pred_check_branch
      %151 = sbr.rel (%p149) target = $region20
    $region19: #{tpu_custom_call.1} parent=5 // pred_region
      // Predicated region
      $region21: #{tpu_custom_call.1} parent=19 // pred_check
        %p152 = pneg %p43
      $region22: #{tpu_custom_call.1} parent=19 // pred_check_branch
        %154 = sbr.rel (%p152) target = $region24
      $region23: #{tpu_custom_call.1} parent=19 // pred_region
        %s155 = smul.u32 8, %s17
        %s156 = ssub.s32 9, %s155
        %p157 = scmp.lt.s32.totalorder %s156, 8
        %s158 = scalar_select %p157, %s156, 8
        %s159 = smul.u32 64, %s158
        %s160 = smul.u32 %s159, 2
        %p161 = scmp.lt.s32.totalorder %s16, 1
        %s162 = scalar_select %p161, %s16, 1
        %p163 = scmp.lt.s32.totalorder %s155, 8
        %s164 = scalar_select %p163, %s155, 8
        %s165 = smul.addr %s164, 2
        %s166 = smul.addr %s162, 18
        %s167 = sadd.s32 %s165, %s166
        %s168 = smul.addr %s167, 4
        %s169 = scalar_lea.vmem %s0, %s168
        %s170 = smul.u32 8, %s17
        %s171 = ssub.s32 9, %s170
        %p172 = scmp.lt.s32.totalorder %s171, 8
        %s173 = scalar_select %p172, %s171, 8
        %s174 = smul.u32 64, %s173
        %s175 = smul.u32 %s174, 2
      $region24: #{tpu_custom_call.1} parent=19 // pred_fallthru
        _
      // Predicated region
      $region25: #{tpu_custom_call.1} parent=19 // pred_check
        %p176 = pneg %p75
      $region26: #{tpu_custom_call.1} parent=19 // pred_check_branch
        %178 = sbr.rel (%p176) target = $region28
      $region27: #{tpu_custom_call.1} parent=19 // pred_region
        %s179 = smul.u32 %s17, 8
        %s180 = sadd.s32 %s179, 8
        %p181 = scmp.lt.s32.totalorder %s16, 1
        %s182 = scalar_select %p181, %s16, 1
        %p183 = scmp.lt.s32.totalorder %s180, 8
        %s184 = scalar_select %p183, %s180, 8
        %s185 = smul.addr %s184, 2
        %s186 = smul.addr %s182, 18
        %s187 = sadd.s32 %s185, %s186
        %s188 = smul.addr %s187, 4
        %s189 = scalar_lea.vmem %s1, %s188
        %s190 = smul.u32 %s17, 8
        %s191 = sadd.s32 %s190, 8
      $region28: #{tpu_custom_call.1} parent=19 // pred_fallthru
        _
    $region20: #{tpu_custom_call.1} parent=5 // pred_fallthru
      _
    %p192 = scmp.le.s32.totalorder 1, %s9
    %p193 = scmp.lt.s32.totalorder %s9, 3
    %p194 = pnand %p192, %p193
    %p195 = pneg %p194
    // Predicated region
    $region29: #{tpu_custom_call.1} parent=5 // pred_check
      _
    $region30: #{tpu_custom_call.1} parent=5 // pred_check_branch
      %197 = sbr.rel (%p194) target = $region32
    $region31: #{tpu_custom_call.1} parent=5 // pred_region
      %s198 = ssub.s32 %s9, 1
      %s199 = smul.u32 8, %s19
      %s200 = ssub.s32 9, %s199
      %p201 = scmp.lt.s32.totalorder %s200, 8
      %s202 = scalar_select %p201, %s200, 8
      %s203 = smul.u32 64, %s202
      %s204 = smul.u32 %s203, 2
      %p205 = scmp.lt.s32.totalorder %s18, 1
      %s206 = scalar_select %p205, %s18, 1
      %p207 = scmp.lt.s32.totalorder %s199, 8
      %s208 = scalar_select %p207, %s199, 8
      %s209 = smul.addr %s208, 2
      %s210 = smul.addr %s206, 18
      %s211 = sadd.s32 %s209, %s210
      %s212 = smul.addr %s211, 4
      %s213 = scalar_lea.vmem %s0, %s212
      %p214 = pneg %p49
      %p215 = pneg %p46
      %s216 = smul.u32 %s19, 8
      %s217 = sadd.s32 %s216, 8
      %p218 = scmp.lt.s32.totalorder %s18, 1
      %s219 = scalar_select %p218, %s18, 1
      %p220 = scmp.lt.s32.totalorder %s217, 8
      %s221 = scalar_select %p220, %s217, 8
      %s222 = smul.addr %s221, 2
      %s223 = smul.addr %s219, 18
      %s224 = sadd.s32 %s222, %s223
      %s225 = smul.addr %s224, 4
      %s226 = scalar_lea.vmem %s1, %s225
      %p227 = pneg %p81
      %p228 = pneg %p78
      %p229 = pneg %p102
      %p230 = pneg %p99
      %p231 = pneg %p130
      %p232 = pneg %p127
      %p233 = scmp.lt.s32.totalorder %s18, 1
      %s234 = scalar_select %p233, %s18, 1
      %p235 = scmp.lt.s32.totalorder %s19, 0
      %s236 = scalar_select %p235, %s19, 0
      %s237 = sadd.s32 %s236, %s234
      %s238 = smul.addr %s237, 8
      %s239 = scalar_lea.vmem %s3, %s238
      %s240 = smul.u32 8, %s19
      %s241 = ssub.s32 9, %s240
      %p242 = scmp.lt.s32.totalorder %s241, 8
      %s243 = scalar_select %p242, %s241, 8
      %s244 = smul.u32 64, %s243
      %s245 = smul.u32 %s244, 2
      %p246 = scmp.lt.s32.totalorder %s18, 1
      %s247 = scalar_select %p246, %s18, 1
      %p248 = scmp.lt.s32.totalorder %s240, 8
      %s249 = scalar_select %p248, %s240, 8
      %s250 = smul.addr %s249, 2
      %s251 = smul.addr %s247, 18
      %s252 = sadd.s32 %s250, %s251
      %s253 = smul.addr %s252, 4
      %s254 = scalar_lea.vmem %s0, %s253
      %s255 = smul.u32 8, %s19
      %s256 = ssub.s32 9, %s255
      %p257 = scmp.lt.s32.totalorder %s256, 8
      %s258 = scalar_select %p257, %s256, 8
      %s259 = smul.u32 64, %s258
      %s260 = smul.u32 %s259, 2
      %s261 = smul.u32 %s19, 8
      %s262 = sadd.s32 %s261, 8
      %p263 = scmp.lt.s32.totalorder %s18, 1
      %s264 = scalar_select %p263, %s18, 1
      %p265 = scmp.lt.s32.totalorder %s262, 8
      %s266 = scalar_select %p265, %s262, 8
      %s267 = smul.addr %s266, 2
      %s268 = smul.addr %s264, 18
      %s269 = sadd.s32 %s267, %s268
      %s270 = smul.addr %s269, 4
      %s271 = scalar_lea.vmem %s1, %s270
      %s272 = smul.u32 %s19, 8
      %s273 = sadd.s32 %s272, 8
      %p274 = scmp.lt.s32.totalorder %s18, 1
      %s275 = scalar_select %p274, %s18, 1
      %p276 = scmp.lt.s32.totalorder %s19, 0
      %s277 = scalar_select %p276, %s19, 0
      %s278 = sadd.s32 %s277, %s275
      %s279 = smul.addr %s278, 8
      %s280 = scalar_lea.vmem %s3, %s279
      %v282 = vld [vmem:[%s254] sm:$0xf]
      %v283 = vld [vmem:[%s254 + $0x4] sm:$0xf]
      %v284 = vld [vmem:[%s254 + $0x8] sm:$0xf]
      %v285 = vld [vmem:[%s254 + $0xc] sm:$0xf]
      %v286 = vld [vmem:[%s254 + $0x10] sm:$0xf]
      %v287 = vld [vmem:[%s254 + $0x14] sm:$0xf]
      %v288 = vld [vmem:[%s254 + $0x18] sm:$0xf]
      %v289 = vld [vmem:[%s254 + $0x1c] sm:$0xf]
      %v290 = vld [vmem:[%s254 + $0x20] sm:$0xf]
      %v291 = vld [vmem:[%s254 + $0x24] sm:$0xf]
      %v292 = vld [vmem:[%s254 + $0x28] sm:$0xf]
      %v293 = vld [vmem:[%s254 + $0x2c] sm:$0xf]
      %v294 = vld [vmem:[%s254 + $0x30] sm:$0xf]
      %v295 = vld [vmem:[%s254 + $0x34] sm:$0xf]
      %v296 = vld [vmem:[%s254 + $0x38] sm:$0xf]
      %v297 = vld [vmem:[%s254 + $0x3c] sm:$0xf]
      %v298 = vld [vmem:[%s271] sm:$0xf]
      %v299 = vld [vmem:[%s271 + $0x4] sm:$0xf]
      %v316 = vunpack.c.l.b16 %v282
      %v317 = vunpack.c.l.b16 %v283
      %v318 = vunpack.c.l.b16 %v284
      %v319 = vunpack.c.l.b16 %v285
      %v320 = vunpack.c.l.b16 %v286
      %v321 = vunpack.c.l.b16 %v287
      %v322 = vunpack.c.l.b16 %v288
      %v323 = vunpack.c.l.b16 %v289
      %v324 = vunpack.c.l.b16 %v290
      %v325 = vunpack.c.l.b16 %v291
      %v326 = vunpack.c.l.b16 %v292
      %v327 = vunpack.c.l.b16 %v293
      %v328 = vunpack.c.l.b16 %v294
      %v329 = vunpack.c.l.b16 %v295
      %v330 = vunpack.c.l.b16 %v296
      %v331 = vunpack.c.l.b16 %v297
      %v332 = vpack.c.b16 %v317, %v316
      %v333 = vpack.c.b16 %v319, %v318
      %v334 = vpack.c.b16 %v321, %v320
      %v335 = vpack.c.b16 %v323, %v322
      %v336 = vpack.c.b16 %v325, %v324
      %v337 = vpack.c.b16 %v327, %v326
      %v338 = vpack.c.b16 %v329, %v328
      %v339 = vpack.c.b16 %v331, %v330
      %348 = vrot.lane.b32.xlu0 %v332, 127
      %v349 = vpop.permute.xlu0 %348
      %350 = vrot.lane.b32.xlu0 %v333, 127
      %v351 = vpop.permute.xlu0 %350
      %352 = vrot.lane.b32.xlu0 %v334, 127
      %v353 = vpop.permute.xlu0 %352
      %354 = vrot.lane.b32.xlu0 %v335, 127
      %v355 = vpop.permute.xlu0 %354
      %356 = vrot.lane.b32.xlu0 %v336, 127
      %v357 = vpop.permute.xlu0 %356
      %358 = vrot.lane.b32.xlu0 %v337, 127
      %v359 = vpop.permute.xlu0 %358
      %360 = vrot.lane.b32.xlu0 %v338, 127
      %v361 = vpop.permute.xlu0 %360
      %362 = vrot.lane.b32.xlu0 %v339, 127
      %v363 = vpop.permute.xlu0 %362
      %v374 = vunpack.c.l.b16 %v298
      %v375 = vunpack.c.l.b16 %v299
      %v376 = vpack.c.b16 %v375, %v374
      %378 = vrot.lane.b32.xlu0 %v376, 127
      %v379 = vpop.permute.xlu0 %378
      %v381 = vunpack.c.l.bf16 %v283
      %v382 = vunpack.c.l.bf16 %v285
      %v383 = vunpack.c.l.bf16 %v287
      %v384 = vunpack.c.l.bf16 %v289
      %v385 = vunpack.c.l.bf16 %v291
      %v386 = vunpack.c.l.bf16 %v293
      %v387 = vunpack.c.l.bf16 %v295
      %v388 = vunpack.c.l.bf16 %v297
      %v397 = vrot.slane %v381, 4
      %v398 = vrot.slane %v382, 4
      %v399 = vrot.slane %v383, 4
      %v400 = vrot.slane %v384, 4
      %v401 = vrot.slane %v385, 4
      %v402 = vrot.slane %v386, 4
      %v403 = vrot.slane %v387, 4
      %v404 = vrot.slane %v388, 4
      %405 = vrot.lane.b32.xlu0 %v397, 127
      %v406 = vpop.permute.xlu0 %405
      %407 = vrot.lane.b32.xlu0 %v398, 127
      %v408 = vpop.permute.xlu0 %407
      %409 = vrot.lane.b32.xlu0 %v399, 127
      %v410 = vpop.permute.xlu0 %409
      %411 = vrot.lane.b32.xlu0 %v400, 127
      %v412 = vpop.permute.xlu0 %411
      %413 = vrot.lane.b32.xlu0 %v401, 127
      %v414 = vpop.permute.xlu0 %413
      %415 = vrot.lane.b32.xlu0 %v402, 127
      %v416 = vpop.permute.xlu0 %415
      %417 = vrot.lane.b32.xlu0 %v403, 127
      %v418 = vpop.permute.xlu0 %417
      %419 = vrot.lane.b32.xlu0 %v404, 127
      %v420 = vpop.permute.xlu0 %419
      %v429 = vmax.f32 %v381, %v406
      %v430 = vmax.f32 %v382, %v408
      %v431 = vmax.f32 %v383, %v410
      %v432 = vmax.f32 %v384, %v412
      %v433 = vmax.f32 %v385, %v414
      %v434 = vmax.f32 %v386, %v416
      %v435 = vmax.f32 %v387, %v418
      %v436 = vmax.f32 %v388, %v420
      %v437 = vunpack.c.l.bf16 %v284
      %v438 = vunpack.c.l.bf16 %v286
      %v439 = vunpack.c.l.bf16 %v288
      %v440 = vunpack.c.l.bf16 %v290
      %v441 = vunpack.c.l.bf16 %v292
      %v442 = vunpack.c.l.bf16 %v294
      %v443 = vunpack.c.l.bf16 %v296
      %v444 = vunpack.c.l.bf16 %v298
      %v453 = vrot.slane %v437, 4
      %v454 = vrot.slane %v438, 4
      %v455 = vrot.slane %v439, 4
      %v456 = vrot.slane %v440, 4
      %v457 = vrot.slane %v441, 4
      %v458 = vrot.slane %v442, 4
      %v459 = vrot.slane %v443, 4
      %v460 = vrot.slane %v444, 4
      %461 = vrot.lane.b32.xlu0 %v453, 127
      %v462 = vpop.permute.xlu0 %461
      %463 = vrot.lane.b32.xlu0 %v454, 127
      %v464 = vpop.permute.xlu0 %463
      %465 = vrot.lane.b32.xlu0 %v455, 127
      %v466 = vpop.permute.xlu0 %465
      %467 = vrot.lane.b32.xlu0 %v456, 127
      %v468 = vpop.permute.xlu0 %467
      %469 = vrot.lane.b32.xlu0 %v457, 127
      %v470 = vpop.permute.xlu0 %469
      %471 = vrot.lane.b32.xlu0 %v458, 127
      %v472 = vpop.permute.xlu0 %471
      %473 = vrot.lane.b32.xlu0 %v459, 127
      %v474 = vpop.permute.xlu0 %473
      %475 = vrot.lane.b32.xlu0 %v460, 127
      %v476 = vpop.permute.xlu0 %475
      %v485 = vmax.f32 %v437, %v462
      %v486 = vmax.f32 %v438, %v464
      %v487 = vmax.f32 %v439, %v466
      %v488 = vmax.f32 %v440, %v468
      %v489 = vmax.f32 %v441, %v470
      %v490 = vmax.f32 %v442, %v472
      %v491 = vmax.f32 %v443, %v474
      %v492 = vmax.f32 %v444, %v476
      %v493 = vmax.f32 %v429, %v485
      %v494 = vmax.f32 %v430, %v486
      %v495 = vmax.f32 %v431, %v487
      %v496 = vmax.f32 %v432, %v488
      %v497 = vmax.f32 %v433, %v489
      %v498 = vmax.f32 %v434, %v490
      %v499 = vmax.f32 %v435, %v491
      %v500 = vmax.f32 %v436, %v492
      %v501 = vld [vmem:[%s2] sm:$0x3]
      %vm502 = vcmask 523264
      %v504 = vsel %vm502, %v501, 0
      %506 = vmatprep.subr.bf16.mxu0 0
      %507 = vmatpush1.bf16.msra.mxu0 %v332
      %508 = vmatprep.subr.bf16.mxu0 0
      %509 = vmatpush1.bf16.msra.mxu0 %v349
      %510 = vmatprep.subr.bf16.mxu0 0
      %511 = vmatpush1.bf16.msra.mxu0 %v333
      %512 = vmatprep.subr.bf16.mxu0 0
      %513 = vmatpush1.bf16.msra.mxu0 %v351
      %514 = vmatprep.subr.bf16.mxu0 0
      %515 = vmatpush1.bf16.msra.mxu0 0
      %516 = vmatprep.subr.bf16.mxu0 0
      %517 = vmatpush1.bf16.msra.mxu0 0
      %518 = vmatprep.subr.bf16.mxu0 0
      %519 = vmatpush1.bf16.msra.mxu0 0
      %520 = vmatprep.subr.bf16.mxu0 0
      %521 = vmatpush1.bf16.msra.mxu0 0
      %522 = vmatprep.subr.bf16.mxu0 0
      %523 = vmatpush1.bf16.msra.mxu0 0
      %524 = vmatprep.subr.bf16.mxu0 0
      %525 = vmatpush1.bf16.msra.mxu0 0
      %526 = vmatprep.subr.bf16.mxu0 0
      %527 = vmatpush1.bf16.msra.mxu0 0
      %528 = vmatprep.subr.bf16.mxu0 0
      %529 = vmatpush1.bf16.msra.mxu0 0
      %530 = vmatprep.subr.bf16.mxu0 0
      %531 = vmatpush1.bf16.msra.mxu0 0
      %532 = vmatprep.subr.bf16.mxu0 0
      %533 = vmatpush1.bf16.msra.mxu0 0
      %534 = vmatprep.subr.bf16.mxu0 0
      %535 = vmatpush1.bf16.msra.mxu0 0
      %536 = vmatprep.subr.bf16.mxu0 0
      %537 = vmatpush1.bf16.msra.mxu0 0
      %538 = vmatprep.mubr.bf16.mxu0 0
      %539 = vmatmul.mubr.bf16.gmra.mrb[0].mxu0 %v504
      %v540 = vpop.f32.mrb[0].mxu0
      %v541 = vadd.f32 0.0, %v540
      %v542 = vpop.f32.mrb[0].mxu0
      %v543 = vpop.f32.mrb[0].mxu0
      %v544 = vpop.f32.mrb[0].mxu0
      %545 = vdwg.mxu0
      %vm546 = vcmask 60416
      %v547 = vsel %vm546, %v541, 0.0
      %548 = vadd.xlane.f32.xlu0 %v547
      %v549 = vpop.xlane.xlu0 %548
      %v550 = vadd.f32 %v549, 0.0
      %v551 = vmul.f32 %v541, %v541
      %v552 = vsel %vm546, %v551, 0.0
      %553 = vadd.xlane.f32.xlu0 %v552
      %v554 = vpop.xlane.xlu0 %553
      %v555 = vadd.f32 %v554, 0.0
      %556 = vmatprep.subr.bf16.mxu0 0
      %557 = vmatpush1.bf16.msra.mxu0 %v333
      %558 = vmatprep.subr.bf16.mxu0 0
      %559 = vmatpush1.bf16.msra.mxu0 %v351
      %560 = vmatprep.subr.bf16.mxu0 0
      %561 = vmatpush1.bf16.msra.mxu0 %v334
      %562 = vmatprep.subr.bf16.mxu0 0
      %563 = vmatpush1.bf16.msra.mxu0 %v353
      %564 = vmatprep.subr.bf16.mxu0 0
      %565 = vmatpush1.bf16.msra.mxu0 0
      %566 = vmatprep.subr.bf16.mxu0 0
      %567 = vmatpush1.bf16.msra.mxu0 0
      %568 = vmatprep.subr.bf16.mxu0 0
      %569 = vmatpush1.bf16.msra.mxu0 0
      %570 = vmatprep.subr.bf16.mxu0 0
      %571 = vmatpush1.bf16.msra.mxu0 0
      %572 = vmatprep.subr.bf16.mxu0 0
      %573 = vmatpush1.bf16.msra.mxu0 0
      %574 = vmatprep.subr.bf16.mxu0 0
      %575 = vmatpush1.bf16.msra.mxu0 0
      %576 = vmatprep.subr.bf16.mxu0 0
      %577 = vmatpush1.bf16.msra.mxu0 0
      %578 = vmatprep.subr.bf16.mxu0 0
      %579 = vmatpush1.bf16.msra.mxu0 0
      %580 = vmatprep.subr.bf16.mxu0 0
      %581 = vmatpush1.bf16.msra.mxu0 0
      %582 = vmatprep.subr.bf16.mxu0 0
      %583 = vmatpush1.bf16.msra.mxu0 0
      %584 = vmatprep.subr.bf16.mxu0 0
      %585 = vmatpush1.bf16.msra.mxu0 0
      %586 = vmatprep.subr.bf16.mxu0 0
      %587 = vmatpush1.bf16.msra.mxu0 0
      %588 = vmatprep.mubr.bf16.mxu0 0
      %589 = vmatmul.mubr.bf16.gmra.mrb[0].mxu0 %v504
      %v590 = vpop.f32.mrb[0].mxu0
      %v591 = vadd.f32 0.0, %v590
      %v592 = vpop.f32.mrb[0].mxu0
      %v593 = vpop.f32.mrb[0].mxu0
      %v594 = vpop.f32.mrb[0].mxu0
      %595 = vdwg.mxu0
      %v596 = vsel %vm546, %v591, 0.0
      %597 = vadd.xlane.f32.xlu0 %v596
      %v598 = vpop.xlane.xlu0 %597
      %v599 = vadd.f32 %v550, %v598
      %v600 = vmul.f32 %v591, %v591
      %v601 = vsel %vm546, %v600, 0.0
      %602 = vadd.xlane.f32.xlu0 %v601
      %v603 = vpop.xlane.xlu0 %602
      %v604 = vadd.f32 %v555, %v603
      %605 = vmatprep.subr.bf16.mxu0 0
      %606 = vmatpush1.bf16.msra.mxu0 %v334
      %607 = vmatprep.subr.bf16.mxu0 0
      %608 = vmatpush1.bf16.msra.mxu0 %v353
      %609 = vmatprep.subr.bf16.mxu0 0
      %610 = vmatpush1.bf16.msra.mxu0 %v335
      %611 = vmatprep.subr.bf16.mxu0 0
      %612 = vmatpush1.bf16.msra.mxu0 %v355
      %613 = vmatprep.subr.bf16.mxu0 0
      %614 = vmatpush1.bf16.msra.mxu0 0
      %615 = vmatprep.subr.bf16.mxu0 0
      %616 = vmatpush1.bf16.msra.mxu0 0
      %617 = vmatprep.subr.bf16.mxu0 0
      %618 = vmatpush1.bf16.msra.mxu0 0
      %619 = vmatprep.subr.bf16.mxu0 0
      %620 = vmatpush1.bf16.msra.mxu0 0
      %621 = vmatprep.subr.bf16.mxu0 0
      %622 = vmatpush1.bf16.msra.mxu0 0
      %623 = vmatprep.subr.bf16.mxu0 0
      %624 = vmatpush1.bf16.msra.mxu0 0
      %625 = vmatprep.subr.bf16.mxu0 0
      %626 = vmatpush1.bf16.msra.mxu0 0
      %627 = vmatprep.subr.bf16.mxu0 0
      %628 = vmatpush1.bf16.msra.mxu0 0
      %629 = vmatprep.subr.bf16.mxu0 0
      %630 = vmatpush1.bf16.msra.mxu0 0
      %631 = vmatprep.subr.bf16.mxu0 0
      %632 = vmatpush1.bf16.msra.mxu0 0
      %633 = vmatprep.subr.bf16.mxu0 0
      %634 = vmatpush1.bf16.msra.mxu0 0
      %635 = vmatprep.subr.bf16.mxu0 0
      %636 = vmatpush1.bf16.msra.mxu0 0
      %637 = vmatprep.mubr.bf16.mxu0 0
      %638 = vmatmul.mubr.bf16.gmra.mrb[0].mxu0 %v504
      %v639 = vpop.f32.mrb[0].mxu0
      %v640 = vadd.f32 0.0, %v639
      %v641 = vpop.f32.mrb[0].mxu0
      %v642 = vpop.f32.mrb[0].mxu0
      %v643 = vpop.f32.mrb[0].mxu0
      %644 = vdwg.mxu0
      %v645 = vsel %vm546, %v640, 0.0
      %646 = vadd.xlane.f32.xlu0 %v645
      %v647 = vpop.xlane.xlu0 %646
      %v648 = vadd.f32 %v599, %v647
      %v649 = vmul.f32 %v640, %v640
      %v650 = vsel %vm546, %v649, 0.0
      %651 = vadd.xlane.f32.xlu0 %v650
      %v652 = vpop.xlane.xlu0 %651
      %v653 = vadd.f32 %v604, %v652
      %654 = vmatprep.subr.bf16.mxu0 0
      %655 = vmatpush1.bf16.msra.mxu0 %v335
      %656 = vmatprep.subr.bf16.mxu0 0
      %657 = vmatpush1.bf16.msra.mxu0 %v355
      %658 = vmatprep.subr.bf16.mxu0 0
      %659 = vmatpush1.bf16.msra.mxu0 %v336
      %660 = vmatprep.subr.bf16.mxu0 0
      %661 = vmatpush1.bf16.msra.mxu0 %v357
      %662 = vmatprep.subr.bf16.mxu0 0
      %663 = vmatpush1.bf16.msra.mxu0 0
      %664 = vmatprep.subr.bf16.mxu0 0
      %665 = vmatpush1.bf16.msra.mxu0 0
      %666 = vmatprep.subr.bf16.mxu0 0
      %667 = vmatpush1.bf16.msra.mxu0 0
      %668 = vmatprep.subr.bf16.mxu0 0
      %669 = vmatpush1.bf16.msra.mxu0 0
      %670 = vmatprep.subr.bf16.mxu0 0
      %671 = vmatpush1.bf16.msra.mxu0 0
      %672 = vmatprep.subr.bf16.mxu0 0
      %673 = vmatpush1.bf16.msra.mxu0 0
      %674 = vmatprep.subr.bf16.mxu0 0
      %675 = vmatpush1.bf16.msra.mxu0 0
      %676 = vmatprep.subr.bf16.mxu0 0
      %677 = vmatpush1.bf16.msra.mxu0 0
      %678 = vmatprep.subr.bf16.mxu0 0
      %679 = vmatpush1.bf16.msra.mxu0 0
      %680 = vmatprep.subr.bf16.mxu0 0
      %681 = vmatpush1.bf16.msra.mxu0 0
      %682 = vmatprep.subr.bf16.mxu0 0
      %683 = vmatpush1.bf16.msra.mxu0 0
      %684 = vmatprep.subr.bf16.mxu0 0
      %685 = vmatpush1.bf16.msra.mxu0 0
      %686 = vmatprep.mubr.bf16.mxu0 0
      %687 = vmatmul.mubr.bf16.gmra.mrb[0].mxu0 %v504
      %v688 = vpop.f32.mrb[0].mxu0
      %v689 = vadd.f32 0.0, %v688
      %v690 = vpop.f32.mrb[0].mxu0
      %v691 = vpop.f32.mrb[0].mxu0
      %v692 = vpop.f32.mrb[0].mxu0
      %693 = vdwg.mxu0
      %v694 = vsel %vm546, %v689, 0.0
      %695 = vadd.xlane.f32.xlu0 %v694
      %v696 = vpop.xlane.xlu0 %695
      %v697 = vadd.f32 %v648, %v696
      %v698 = vmul.f32 %v689, %v689
      %v699 = vsel %vm546, %v698, 0.0
      %700 = vadd.xlane.f32.xlu0 %v699
      %v701 = vpop.xlane.xlu0 %700
      %v702 = vadd.f32 %v653, %v701
      %703 = vmatprep.subr.bf16.mxu0 0
      %704 = vmatpush1.bf16.msra.mxu0 %v336
      %705 = vmatprep.subr.bf16.mxu0 0
      %706 = vmatpush1.bf16.msra.mxu0 %v357
      %707 = vmatprep.subr.bf16.mxu0 0
      %708 = vmatpush1.bf16.msra.mxu0 %v337
      %709 = vmatprep.subr.bf16.mxu0 0
      %710 = vmatpush1.bf16.msra.mxu0 %v359
      %711 = vmatprep.subr.bf16.mxu0 0
      %712 = vmatpush1.bf16.msra.mxu0 0
      %713 = vmatprep.subr.bf16.mxu0 0
      %714 = vmatpush1.bf16.msra.mxu0 0
      %715 = vmatprep.subr.bf16.mxu0 0
      %716 = vmatpush1.bf16.msra.mxu0 0
      %717 = vmatprep.subr.bf16.mxu0 0
      %718 = vmatpush1.bf16.msra.mxu0 0
      %719 = vmatprep.subr.bf16.mxu0 0
      %720 = vmatpush1.bf16.msra.mxu0 0
      %721 = vmatprep.subr.bf16.mxu0 0
      %722 = vmatpush1.bf16.msra.mxu0 0
      %723 = vmatprep.subr.bf16.mxu0 0
      %724 = vmatpush1.bf16.msra.mxu0 0
      %725 = vmatprep.subr.bf16.mxu0 0
      %726 = vmatpush1.bf16.msra.mxu0 0
      %727 = vmatprep.subr.bf16.mxu0 0
      %728 = vmatpush1.bf16.msra.mxu0 0
      %729 = vmatprep.subr.bf16.mxu0 0
      %730 = vmatpush1.bf16.msra.mxu0 0
      %731 = vmatprep.subr.bf16.mxu0 0
      %732 = vmatpush1.bf16.msra.mxu0 0
      %733 = vmatprep.subr.bf16.mxu0 0
      %734 = vmatpush1.bf16.msra.mxu0 0
      %735 = vmatprep.mubr.bf16.mxu0 0
      %736 = vmatmul.mubr.bf16.gmra.mrb[0].mxu0 %v504
      %v737 = vpop.f32.mrb[0].mxu0
      %v738 = vadd.f32 0.0, %v737
      %v739 = vpop.f32.mrb[0].mxu0
      %v740 = vpop.f32.mrb[0].mxu0
      %v741 = vpop.f32.mrb[0].mxu0
      %742 = vdwg.mxu0
      %v743 = vsel %vm546, %v738, 0.0
      %744 = vadd.xlane.f32.xlu0 %v743
      %v745 = vpop.xlane.xlu0 %744
      %v746 = vadd.f32 %v697, %v745
      %v747 = vmul.f32 %v738, %v738
      %v748 = vsel %vm546, %v747, 0.0
      %749 = vadd.xlane.f32.xlu0 %v748
      %v750 = vpop.xlane.xlu0 %749
      %v751 = vadd.f32 %v702, %v750
      %752 = vmatprep.subr.bf16.mxu0 0
      %753 = vmatpush1.bf16.msra.mxu0 %v337
      %754 = vmatprep.subr.bf16.mxu0 0
      %755 = vmatpush1.bf16.msra.mxu0 %v359
      %756 = vmatprep.subr.bf16.mxu0 0
      %757 = vmatpush1.bf16.msra.mxu0 %v338
      %758 = vmatprep.subr.bf16.mxu0 0
      %759 = vmatpush1.bf16.msra.mxu0 %v361
      %760 = vmatprep.subr.bf16.mxu0 0
      %761 = vmatpush1.bf16.msra.mxu0 0
      %762 = vmatprep.subr.bf16.mxu0 0
      %763 = vmatpush1.bf16.msra.mxu0 0
      %764 = vmatprep.subr.bf16.mxu0 0
      %765 = vmatpush1.bf16.msra.mxu0 0
      %766 = vmatprep.subr.bf16.mxu0 0
      %767 = vmatpush1.bf16.msra.mxu0 0
      %768 = vmatprep.subr.bf16.mxu0 0
      %769 = vmatpush1.bf16.msra.mxu0 0
      %770 = vmatprep.subr.bf16.mxu0 0
      %771 = vmatpush1.bf16.msra.mxu0 0
      %772 = vmatprep.subr.bf16.mxu0 0
      %773 = vmatpush1.bf16.msra.mxu0 0
      %774 = vmatprep.subr.bf16.mxu0 0
      %775 = vmatpush1.bf16.msra.mxu0 0
      %776 = vmatprep.subr.bf16.mxu0 0
      %777 = vmatpush1.bf16.msra.mxu0 0
      %778 = vmatprep.subr.bf16.mxu0 0
      %779 = vmatpush1.bf16.msra.mxu0 0
      %780 = vmatprep.subr.bf16.mxu0 0
      %781 = vmatpush1.bf16.msra.mxu0 0
      %782 = vmatprep.subr.bf16.mxu0 0
      %783 = vmatpush1.bf16.msra.mxu0 0
      %784 = vmatprep.mubr.bf16.mxu0 0
      %785 = vmatmul.mubr.bf16.gmra.mrb[0].mxu0 %v504
      %v786 = vpop.f32.mrb[0].mxu0
      %v787 = vadd.f32 0.0, %v786
      %v788 = vpop.f32.mrb[0].mxu0
      %v789 = vpop.f32.mrb[0].mxu0
      %v790 = vpop.f32.mrb[0].mxu0
      %791 = vdwg.mxu0
      %v792 = vsel %vm546, %v787, 0.0
      %793 = vadd.xlane.f32.xlu0 %v792
      %v794 = vpop.xlane.xlu0 %793
      %v795 = vadd.f32 %v746, %v794
      %v796 = vmul.f32 %v787, %v787
      %v797 = vsel %vm546, %v796, 0.0
      %798 = vadd.xlane.f32.xlu0 %v797
      %v799 = vpop.xlane.xlu0 %798
      %v800 = vadd.f32 %v751, %v799
      %801 = vmatprep.subr.bf16.mxu0 0
      %802 = vmatpush1.bf16.msra.mxu0 %v338
      %803 = vmatprep.subr.bf16.mxu0 0
      %804 = vmatpush1.bf16.msra.mxu0 %v361
      %805 = vmatprep.subr.bf16.mxu0 0
      %806 = vmatpush1.bf16.msra.mxu0 %v339
      %807 = vmatprep.subr.bf16.mxu0 0
      %808 = vmatpush1.bf16.msra.mxu0 %v363
      %809 = vmatprep.subr.bf16.mxu0 0
      %810 = vmatpush1.bf16.msra.mxu0 0
      %811 = vmatprep.subr.bf16.mxu0 0
      %812 = vmatpush1.bf16.msra.mxu0 0
      %813 = vmatprep.subr.bf16.mxu0 0
      %814 = vmatpush1.bf16.msra.mxu0 0
      %815 = vmatprep.subr.bf16.mxu0 0
      %816 = vmatpush1.bf16.msra.mxu0 0
      %817 = vmatprep.subr.bf16.mxu0 0
      %818 = vmatpush1.bf16.msra.mxu0 0
      %819 = vmatprep.subr.bf16.mxu0 0
      %820 = vmatpush1.bf16.msra.mxu0 0
      %821 = vmatprep.subr.bf16.mxu0 0
      %822 = vmatpush1.bf16.msra.mxu0 0
      %823 = vmatprep.subr.bf16.mxu0 0
      %824 = vmatpush1.bf16.msra.mxu0 0
      %825 = vmatprep.subr.bf16.mxu0 0
      %826 = vmatpush1.bf16.msra.mxu0 0
      %827 = vmatprep.subr.bf16.mxu0 0
      %828 = vmatpush1.bf16.msra.mxu0 0
      %829 = vmatprep.subr.bf16.mxu0 0
      %830 = vmatpush1.bf16.msra.mxu0 0
      %831 = vmatprep.subr.bf16.mxu0 0
      %832 = vmatpush1.bf16.msra.mxu0 0
      %833 = vmatprep.mubr.bf16.mxu0 0
      %834 = vmatmul.mubr.bf16.gmra.mrb[0].mxu0 %v504
      %v835 = vpop.f32.mrb[0].mxu0
      %v836 = vadd.f32 0.0, %v835
      %v837 = vpop.f32.mrb[0].mxu0
      %v838 = vpop.f32.mrb[0].mxu0
      %v839 = vpop.f32.mrb[0].mxu0
      %840 = vdwg.mxu0
      %v841 = vsel %vm546, %v836, 0.0
      %842 = vadd.xlane.f32.xlu0 %v841
      %v843 = vpop.xlane.xlu0 %842
      %v844 = vadd.f32 %v795, %v843
      %v845 = vmul.f32 %v836, %v836
      %v846 = vsel %vm546, %v845, 0.0
      %847 = vadd.xlane.f32.xlu0 %v846
      %v848 = vpop.xlane.xlu0 %847
      %v849 = vadd.f32 %v800, %v848
      %850 = vmatprep.subr.bf16.mxu0 0
      %851 = vmatpush1.bf16.msra.mxu0 %v339
      %852 = vmatprep.subr.bf16.mxu0 0
      %853 = vmatpush1.bf16.msra.mxu0 %v363
      %854 = vmatprep.subr.bf16.mxu0 0
      %855 = vmatpush1.bf16.msra.mxu0 %v376
      %856 = vmatprep.subr.bf16.mxu0 0
      %857 = vmatpush1.bf16.msra.mxu0 %v379
      %858 = vmatprep.subr.bf16.mxu0 0
      %859 = vmatpush1.bf16.msra.mxu0 0
      %860 = vmatprep.subr.bf16.mxu0 0
      %861 = vmatpush1.bf16.msra.mxu0 0
      %862 = vmatprep.subr.bf16.mxu0 0
      %863 = vmatpush1.bf16.msra.mxu0 0
      %864 = vmatprep.subr.bf16.mxu0 0
      %865 = vmatpush1.bf16.msra.mxu0 0
      %866 = vmatprep.subr.bf16.mxu0 0
      %867 = vmatpush1.bf16.msra.mxu0 0
      %868 = vmatprep.subr.bf16.mxu0 0
      %869 = vmatpush1.bf16.msra.mxu0 0
      %870 = vmatprep.subr.bf16.mxu0 0
      %871 = vmatpush1.bf16.msra.mxu0 0
      %872 = vmatprep.subr.bf16.mxu0 0
      %873 = vmatpush1.bf16.msra.mxu0 0
      %874 = vmatprep.subr.bf16.mxu0 0
      %875 = vmatpush1.bf16.msra.mxu0 0
      %876 = vmatprep.subr.bf16.mxu0 0
      %877 = vmatpush1.bf16.msra.mxu0 0
      %878 = vmatprep.subr.bf16.mxu0 0
      %879 = vmatpush1.bf16.msra.mxu0 0
      %880 = vmatprep.subr.bf16.mxu0 0
      %881 = vmatpush1.bf16.msra.mxu0 0
      %882 = vmatprep.mubr.bf16.mxu0 0
      %883 = vmatmul.mubr.bf16.gmra.mrb[0].mxu0 %v504
      %v884 = vpop.f32.mrb[0].mxu0
      %v885 = vadd.f32 0.0, %v884
      %v886 = vpop.f32.mrb[0].mxu0
      %v887 = vpop.f32.mrb[0].mxu0
      %v888 = vpop.f32.mrb[0].mxu0
      %889 = vdwg.mxu0
      %v890 = vsel %vm546, %v885, 0.0
      %891 = vadd.xlane.f32.xlu0 %v890
      %v892 = vpop.xlane.xlu0 %891
      %v893 = vadd.f32 %v844, %v892
      %v894 = vmul.f32 %v885, %v885
      %v895 = vsel %vm546, %v894, 0.0
      %896 = vadd.xlane.f32.xlu0 %v895
      %v897 = vpop.xlane.xlu0 %896
      %v898 = vadd.f32 %v849, %v897
      %vm899 = vcmask 64516
      %v900 = vsel %vm899, %v493, 0.0
      %v901 = vsel %vm899, %v494, 0.0
      %v902 = vadd.f32 %v900, %v901
      %v903 = vsel %vm899, %v495, 0.0
      %v904 = vadd.f32 %v902, %v903
      %v905 = vsel %vm899, %v496, 0.0
      %v906 = vadd.f32 %v904, %v905
      %v907 = vsel %vm899, %v497, 0.0
      %v908 = vadd.f32 %v906, %v907
      %v909 = vsel %vm899, %v498, 0.0
      %v910 = vadd.f32 %v908, %v909
      %v911 = vsel %vm899, %v499, 0.0
      %v912 = vadd.f32 %v910, %v911
      %v913 = vsel %vm899, %v500, 0.0
      %v914 = vadd.f32 %v912, %v913
      %v915 = vmul.f32 %v493, %v493
      %v916 = vmul.f32 %v494, %v494
      %v917 = vmul.f32 %v495, %v495
      %v918 = vmul.f32 %v496, %v496
      %v919 = vmul.f32 %v497, %v497
      %v920 = vmul.f32 %v498, %v498
      %v921 = vmul.f32 %v499, %v499
      %v922 = vmul.f32 %v500, %v500
      %v923 = vsel %vm899, %v915, 0.0
      %v924 = vsel %vm899, %v916, 0.0
      %v925 = vadd.f32 %v923, %v924
      %v926 = vsel %vm899, %v917, 0.0
      %v927 = vadd.f32 %v925, %v926
      %v928 = vsel %vm899, %v918, 0.0
      %v929 = vadd.f32 %v927, %v928
      %v930 = vsel %vm899, %v919, 0.0
      %v931 = vadd.f32 %v929, %v930
      %v932 = vsel %vm899, %v920, 0.0
      %v933 = vadd.f32 %v931, %v932
      %v934 = vsel %vm899, %v921, 0.0
      %v935 = vadd.f32 %v933, %v934
      %v936 = vsel %vm899, %v922, 0.0
      %v937 = vadd.f32 %v935, %v936
      %v938 = vsel %vm899, %v914, 0.0
      %939 = vadd.xlane.f32.xlu0 %v938
      %v940 = vpop.xlane.xlu0 %939
      %v941 = vsel %vm899, %v937, 0.0
      %942 = vadd.xlane.f32.xlu0 %v941
      %v943 = vpop.xlane.xlu0 %942
      %vm944 = vcmask 1043456
      %v945 = vsel %vm944, %v893, %v940
      %v946 = vsel %vm944, %v898, %v943
      %948 = vrot.lane.b32.xlu0 %v946, 1
      %v949 = vpop.permute.xlu0 %948
      %vm951 = vcmask 7168
      %v952 = vsel %vm951, %v945, %v949
      %vm953 = vcmask 15360
      %954 = vst.msk [vmem:[%s280] sm:$0xff] %vm953, %v952
      %p955 = scmp.lt.s32.totalorder %s18, 1
      %s956 = scalar_select %p955, %s18, 1
      %p957 = scmp.lt.s32.totalorder %s19, 0
      %s958 = scalar_select %p957, %s19, 0
      %s959 = sadd.s32 %s958, %s956
      %s960 = smul.addr %s959, 8
      %s961 = scalar_lea.vmem %s3, %s960
      // Predicated region
      $region33: #{tpu_custom_call.1} parent=31 // pred_check
        %p962 = pneg %p127
      $region34: #{tpu_custom_call.1} parent=31 // pred_check_branch
        %964 = sbr.rel (%p962) target = $region36
      $region35: #{tpu_custom_call.1} parent=31 // pred_region
        _
      $region36: #{tpu_custom_call.1} parent=31 // pred_fallthru
        _
    $region32: #{tpu_custom_call.1} parent=5 // pred_fallthru
      _
    %p965 = scmp.le.s32.totalorder 2, %s9
    // Predicated region
    $region37: #{tpu_custom_call.1} parent=5 // pred_check
      %p966 = pneg %p965
    $region38: #{tpu_custom_call.1} parent=5 // pred_check_branch
      %968 = sbr.rel (%p966) target = $region40
    $region39: #{tpu_custom_call.1} parent=5 // pred_region
      %s969 = ssub.s32 %s9, 2
      // Predicated region
      $region41: #{tpu_custom_call.1} parent=39 // pred_check
        %p970 = pneg %p133
      $region42: #{tpu_custom_call.1} parent=39 // pred_check_branch
        %972 = sbr.rel (%p970) target = $region44
      $region43: #{tpu_custom_call.1} parent=39 // pred_region
        %p973 = scmp.lt.s32.totalorder %s20, 1
        %s974 = scalar_select %p973, %s20, 1
        %p975 = scmp.lt.s32.totalorder %s21, 0
        %s976 = scalar_select %p975, %s21, 0
        %s977 = sadd.s32 %s976, %s974
        %s978 = smul.addr %s977, 8
        %s979 = scalar_lea.vmem %s3, %s978
      $region44: #{tpu_custom_call.1} parent=39 // pred_fallthru
        _
    $region40: #{tpu_custom_call.1} parent=5 // pred_fallthru
      _
  $region6: #{tpu_custom_call.1} parent=0 // loop_footer
    %s13 = sadd.s32 1, %s9
  $region7: #{tpu_custom_call.1} parent=0 // loop_footer_branch
    %8 = sbr.rel target = $region3
  $region8: #{tpu_custom_call.1} parent=0 // loop_exit
    _

</llo_original>
